<compile_context>
chip_gen: v7x
topology: tpu7x:2x2x1
jax: 0.10.0
libtpu: 0.0.40
codegen_flags: <defaults>
</compile_context>

<pallas_src>
import functools

import jax
import jax.numpy as jnp
from jax.experimental import pallas as pl
from jax.experimental.pallas import tpu as pltpu


# ----------------------------------------------------------------------------
# Pure-JAX reference (also the XLA fallback path for tiny shapes).
# ----------------------------------------------------------------------------
def attention_reference(hidden, encoder_outputs, mask, w_attn, b_attn, v_w):
    """Pure-JAX replica of the PyTorch forward, for verification / fallback."""
    B, S, H = encoder_outputs.shape
    h_rep = jnp.broadcast_to(hidden[:, None, :], (B, S, H))
    cat = jnp.concatenate([h_rep, encoder_outputs], axis=2)          # (B, S, 2H)
    energy = jnp.tanh(cat @ w_attn.T + b_attn)                       # (B, S, H)
    att = (energy @ v_w.T)[..., 0]                                   # (B, S)
    att = jnp.where(mask == 0, -1.0e10, att)
    return jax.nn.softmax(att, axis=1)


# ----------------------------------------------------------------------------
# Tiling heuristics (VMEM-aware).
# ----------------------------------------------------------------------------
_TILE_BUDGET_BYTES = 20 << 20   # conservative per-step working set; fits v7x's
                                # 32 MiB scoped / 64 MiB physical VMEM.


def _round_up(x, m):
    return -(-x // m) * m


def _vmem_bytes(bt, st, s, h):
    """Rough per-grid-step VMEM footprint (bytes) for a (bt, st) tile."""
    f32 = 4
    return (2 * bt * st * h * f32      # enc block (double-buffered)
            + 2 * bt * st * h * f32    # e_proj / energy live intermediates (approx)
            + 2 * h * h * f32          # W_e^T (grid-invariant, still double-buffered)
            + 2 * h * f32              # v row
            + 2 * bt * h * f32         # h_proj block
            + 2 * bt * st * 4          # mask tile (int32)
            + 2 * bt * s * f32         # output block (resident across the seq axis)
            + bt * s * f32)            # scores scratch


def _choose_tiles(b, s, h, budget=_TILE_BUDGET_BYTES):
    """Pick (Bt, St): Bt multiple of 8; St divides S (or equals S)."""
    def fits(bt, st):
        return _vmem_bytes(bt, st, s, h) <= budget

    # Sequence tile: multiple-of-8 divisors of S (sublane-friendly), plus S.
    cands = sorted({d for d in range(8, s + 1, 8) if s % d == 0} | {s})
    fitting = [d for d in cands if fits(8, d)]
    # TODO(synk): online softmax for the case where even the smallest seq tile
    # exceeds the budget (enormous H with no suitable divisor of S).
    st = max(fitting) if fitting else cands[0]

    # Give the pipeline >= 2 sequence steps when the batch axis alone has one.
    if b <= 8 and st == s:
        halves = [d for d in fitting if d <= s // 2]
        if halves:
            st = max(halves)

    # Batch tile: largest multiple-of-8 (power-of-two growth, <= 256) that fits.
    b_ceil = _round_up(b, 8)
    bt = 8
    while bt * 2 <= min(256, b_ceil) and fits(bt * 2, st):
        bt *= 2
    # v7x megacore: keep >= 2 "parallel" batch grid steps when B is big enough.
    if b >= 16:
        bt = min(bt, _round_up((b + 1) // 2, 8))
    return bt, st


# ----------------------------------------------------------------------------
# Kernel.
# ----------------------------------------------------------------------------
def _attention_kernel(hproj_ref, enc_ref, mask_ref, we_ref, v_ref, out_ref,
                      scores_ref, *, bt, st, h):
    # hproj_ref : (Bt, H)       hidden @ W_h^T + bias (hoisted to the wrapper)
    # enc_ref   : (Bt, St, H)   encoder_outputs tile for this (batch, seq) step
    # mask_ref  : (1, Bt, St)   int32 mask tile (0 = masked)
    # we_ref    : (H, H)        W[:, H:]^T  (grid-invariant)
    # v_ref     : (1, H)        v weights   (grid-invariant)
    # out_ref   : (ns, Bt, St)  attention weights, resident across the seq axis
    # scores_ref: (ns, Bt, St)  masked-score scratch, resident across the seq axis
    j = pl.program_id(1)

    # Encoder half of the concat-Linear for this tile: one (Bt*St, H)x(H, H)
    # MXU matmul (2-D dot + reshape of the product; proven Mosaic path).
    enc2 = enc_ref[...].reshape(bt * st, h)
    e_proj = jnp.dot(enc2, we_ref[...], preferred_element_type=jnp.float32)
    e_proj = e_proj.reshape(bt, st, h)

    # Hidden half (precomputed in the wrapper), broadcast over the seq tile.
    energy = jnp.tanh(e_proj + hproj_ref[...][:, None, :])           # (Bt, St, H)

    # v projection (N=1): VPU multiply + lane reduction (keeps the MXU free).
    scores = jnp.sum(energy * v_ref[...][None], axis=-1)             # (Bt, St)

    # Mask this tile and stash it in the resident scratch (leading-dim store).
    scores = jnp.where(mask_ref[0] == 0, jnp.float32(-1.0e10), scores)
    scores_ref[j] = scores

    # Masked softmax over the full sequence once every tile has been scored.
    @pl.when(j == pl.num_programs(1) - 1)
    def _():
        sc = scores_ref[...]                                          # (ns, Bt, St)
        m = jnp.max(jnp.max(sc, axis=2, keepdims=True), axis=0, keepdims=True)
        e = jnp.exp(sc - m)
        denom = jnp.sum(jnp.sum(e, axis=2, keepdims=True), axis=0, keepdims=True)
        out_ref[...] = (e * pl.reciprocal(denom, approx=False)).astype(out_ref.dtype)


# ----------------------------------------------------------------------------
# Wrapper.
# ----------------------------------------------------------------------------
def attention_forward(hidden, encoder_outputs, mask, w_attn, b_attn, v_w,
                      *, force_pallas=False):
    """hidden: (B, H), encoder_outputs: (B, S, H), mask: (B, S) -> (B, S)."""
    B, S, H = encoder_outputs.shape
    f32 = jnp.float32

    # Tiny, lane-sparse problems (S or H << 128) are overhead-dominated in a
    # custom kernel; plain XLA fusion wins, so fall back unless forced.
    if not force_pallas and (S < 128 or H < 128):
        return attention_reference(hidden, encoder_outputs, mask,
                                   w_attn, b_attn, v_w)

    # Hoisted hidden projection (+ bias): one (B,H)x(H,H) XLA matmul for all B,
    # keeping W_h out of the kernel's VMEM working set.
    h_proj = (hidden.astype(f32) @ jnp.transpose(w_attn[:, :H]).astype(f32)
              + b_attn.astype(f32))                               # (B, H)
    we_t = jnp.transpose(w_attn[:, H:]).astype(f32)               # (H, H)
    v_row = v_w.reshape(1, H).astype(f32)                         # (1, H)
    # NOTE: streaming enc / we_t in bf16 would halve HBM bytes on v6e/v7x when
    # the producer already emits bf16; kept f32 here for exact reference parity.
    enc = encoder_outputs.astype(f32)                             # (B, S, H), no pad

    Bt, St = _choose_tiles(B, S, H)
    nb = pl.cdiv(B, Bt)      # partial last batch block: clamped, enc never padded
    ns = S // St             # St divides S (or equals S) by construction

    # Mask pre-arranged as (ns, B, St): a tiny B*S-element reshuffle so the
    # kernel sees exactly one (Bt, St) tile per grid step.
    mask3 = mask.astype(jnp.int32).reshape(B, ns, St).transpose(1, 0, 2)

    est = _vmem_bytes(Bt, St, S, H)
    vmem_limit = int(min(32 << 20, max(16 << 20, (est * 3) // 2 + (2 << 20))))

    kernel = functools.partial(_attention_kernel, bt=Bt, st=St, h=H)

    out3 = pl.pallas_call(
        kernel,
        out_shape=jax.ShapeDtypeStruct((ns, B, St), f32),
        grid_spec=pltpu.PrefetchScalarGridSpec(
            num_scalar_prefetch=0,
            grid=(nb, ns),
            in_specs=[
                pl.BlockSpec((Bt, H), lambda i, j: (i, 0)),         # h_proj (+bias)
                pl.BlockSpec((Bt, St, H), lambda i, j: (i, j, 0)),  # enc tile
                pl.BlockSpec((1, Bt, St), lambda i, j: (j, i, 0)),  # mask tile
                # Grid-invariant weights (revisited every step).  Single-
                # buffering them (pipeline_mode=pl.Buffered(1)) would save
                # H*H*4 bytes of VMEM; kept default-buffered for robustness.
                pl.BlockSpec((H, H), lambda i, j: (0, 0)),          # W[:, H:]^T
                pl.BlockSpec((1, H), lambda i, j: (0, 0)),          # v row
            ],
            out_specs=pl.BlockSpec((ns, Bt, St), lambda i, j: (0, i, 0)),
            scratch_shapes=[pltpu.VMEM((ns, Bt, St), f32)],         # scores scratch
        ),
        compiler_params=pltpu.CompilerParams(
            dimension_semantics=("parallel", "arbitrary"),
            vmem_limit_bytes=vmem_limit,
        ),
    )(h_proj, enc, mask3, we_t, v_row)

    # (ns, B, St) -> (B, S): tiny wrapper-side reshuffle (B*S elements only).
    return out3.transpose(1, 0, 2).reshape(B, S)


# ----------------------------------------------------------------------------
# Demo / correctness check.
# ----------------------------------------------------------------------------
if __name__ == "__main__":
    B, S, H = 2, 8, 32
    key = jax.random.PRNGKey(0)
    k1, k2, k3, k4, k5 = jax.random.split(key, 5)

    # Deterministic parameter init (PyTorch-style uniform bounds).
    bound_attn = 1.0 / jnp.sqrt(2.0 * H)
    bound_v = 1.0 / jnp.sqrt(1.0 * H)
    w_attn = jax.random.uniform(k1, (H, 2 * H), jnp.float32, -bound_attn, bound_attn)
    b_attn = jax.random.uniform(k2, (H,), jnp.float32, -bound_attn, bound_attn)
    v_w = jax.random.uniform(k3, (1, H), jnp.float32, -bound_v, bound_v)

    # Inputs.
    hidden = jax.random.normal(k4, (B, H), jnp.float32)
    encoder_outputs = jax.random.normal(k5, (B, S, H), jnp.float32)
    lengths = jnp.array([8, 5], dtype=jnp.int32)
    mask = (jnp.arange(S)[None, :] < lengths[:, None]).astype(jnp.int32)  # (B, S)

    # Demo shapes sit below the XLA-fallback gate; force the Pallas path so the
    # kernel itself is exercised.
    out = attention_forward(hidden, encoder_outputs, mask, w_attn, b_attn, v_w,
                            force_pallas=True)
    out = jax.block_until_ready(out)

    ref = attention_reference(hidden, encoder_outputs, mask, w_attn, b_attn, v_w)
    assert out.shape == (B, S)
    # Exact (non-approx) softmax normalization -> tight tolerance vs f32 ref.
    assert jnp.allclose(out, ref, rtol=1e-4, atol=1e-5), (out, ref)

    print("KERNEL_OK")
</pallas_src>

<mosaic_0001>
module attributes {stable_mosaic.version = 11 : i64} {
  func.func @_attention_kernel(%arg0: i32, %arg1: i32, %arg2: memref<8x32xf32, #tpu.memory_space<vmem>>, %arg3: memref<8x8x32xf32, #tpu.memory_space<vmem>>, %arg4: memref<1x8x8xi32, #tpu.memory_space<vmem>>, %arg5: memref<32x32xf32, #tpu.memory_space<vmem>>, %arg6: memref<1x32xf32, #tpu.memory_space<vmem>>, %arg7: memref<1x8x8xf32, #tpu.memory_space<vmem>>, %arg8: memref<1x8x8xf32, #tpu.memory_space<vmem>>) attributes {dimension_semantics = [#tpu.dimension_semantics<parallel>, #tpu.dimension_semantics<arbitrary>], iteration_bounds = array<i64: 1, 1>, scalar_prefetch = 0 : i64, scratch_operands = 1 : i64, tpu.core_type = #tpu.core_type<tc>, window_params = [{transform_indices = @transform_0, window_bounds = array<i64: 8, 32>}, {transform_indices = @transform_1, window_bounds = array<i64: 8, 8, 32>}, {transform_indices = @transform_2, window_bounds = array<i64: 1, 8, 8>}, {pipeline_mode = #tpu.pipeline_mode<synchronous>, transform_indices = @transform_3, window_bounds = array<i64: 32, 32>}, {pipeline_mode = #tpu.pipeline_mode<synchronous>, transform_indices = @transform_4, window_bounds = array<i64: 1, 32>}, {transform_indices = @transform_5, window_bounds = array<i64: 1, 8, 8>}]} {
    %c0 = arith.constant 0 : index
    %c0_0 = arith.constant 0 : index
    %c0_1 = arith.constant 0 : index
    %0 = vector.load %arg3[%c0, %c0_0, %c0_1] : memref<8x8x32xf32, #tpu.memory_space<vmem>>, vector<8x8x32xf32>
    %1 = vector.shape_cast %0 : vector<8x8x32xf32> to vector<64x32xf32>
    %c0_2 = arith.constant 0 : index
    %c0_3 = arith.constant 0 : index
    %2 = vector.load %arg5[%c0_2, %c0_3] : memref<32x32xf32, #tpu.memory_space<vmem>>, vector<32x32xf32>
    %cst = arith.constant dense<0.000000e+00> : vector<64x32xf32>
    %3 = tpu.matmul %1, %2, %cst {dimension_numbers = #tpu.dot_dimension_numbers<[1], [0], [0], [1], [0, 0, 1, 1], [], []>} : vector<64x32xf32>, vector<32x32xf32>, vector<64x32xf32> -> vector<64x32xf32>
    %4 = vector.shape_cast %3 : vector<64x32xf32> to vector<8x8x32xf32>
    %c0_4 = arith.constant 0 : index
    %c0_5 = arith.constant 0 : index
    %5 = vector.load %arg2[%c0_4, %c0_5] : memref<8x32xf32, #tpu.memory_space<vmem>>, vector<8x32xf32>
    %6 = vector.shape_cast %5 : vector<8x32xf32> to vector<8x1x32xf32>
    %7 = vector.broadcast %6 : vector<8x1x32xf32> to vector<8x8x32xf32>
    %8 = arith.addf %4, %7 : vector<8x8x32xf32>
    %9 = math.tanh %8 : vector<8x8x32xf32>
    %c0_6 = arith.constant 0 : index
    %c0_7 = arith.constant 0 : index
    %10 = vector.load %arg6[%c0_6, %c0_7] : memref<1x32xf32, #tpu.memory_space<vmem>>, vector<1x32xf32>
    %11 = vector.shape_cast %10 : vector<1x32xf32> to vector<1x1x32xf32>
    %12 = vector.broadcast %11 : vector<1x1x32xf32> to vector<8x8x32xf32>
    %13 = arith.mulf %9, %12 : vector<8x8x32xf32>
    %cst_8 = arith.constant dense<0.000000e+00> : vector<8x8xf32>
    %14 = vector.multi_reduction <add>, %13, %cst_8 [2] : vector<8x8x32xf32> to vector<8x8xf32>
    %c0_9 = arith.constant 0 : index
    %c0_10 = arith.constant 0 : index
    %c0_11 = arith.constant 0 : index
    %15 = vector.load %arg4[%c0_9, %c0_10, %c0_11] : memref<1x8x8xi32, #tpu.memory_space<vmem>>, vector<1x8x8xi32>
    %16 = vector.shape_cast %15 : vector<1x8x8xi32> to vector<8x8xi32>
    %c0_i32 = arith.constant 0 : i32
    %17 = vector.broadcast %c0_i32 : i32 to vector<8x8xi32>
    %18 = arith.cmpi eq, %16, %17 : vector<8x8xi32>
    %cst_12 = arith.constant -1.000000e+10 : f32
    %19 = vector.broadcast %cst_12 : f32 to vector<8x8xf32>
    %20 = arith.select %18, %19, %14 : vector<8x8xi1>, vector<8x8xf32>
    %21 = arith.index_cast %arg1 : i32 to index
    %c0_13 = arith.constant 0 : index
    %c0_14 = arith.constant 0 : index
    %22 = vector.load %arg8[%21, %c0_13, %c0_14] : memref<1x8x8xf32, #tpu.memory_space<vmem>>, vector<1x8x8xf32>
    %23 = vector.shape_cast %22 : vector<1x8x8xf32> to vector<8x8xf32>
    %24 = vector.shape_cast %20 : vector<8x8xf32> to vector<1x8x8xf32>
    tpu.vector_store %arg8[%21, %c0_13, %c0_14], %24 {strides = array<i32>} : memref<1x8x8xf32, #tpu.memory_space<vmem>>, vector<1x8x8xf32>,
    %c0_i32_15 = arith.constant 0 : i32
    %25 = arith.cmpi eq, %arg1, %c0_i32_15 : i32
    %26 = arith.extui %25 : i1 to i32
    %c0_i32_16 = arith.constant 0 : i32
    %27 = arith.cmpi ne, %26, %c0_i32_16 : i32
    scf.if %27 {
      %c0_17 = arith.constant 0 : index
      %c0_18 = arith.constant 0 : index
      %c0_19 = arith.constant 0 : index
      %28 = vector.load %arg8[%c0_17, %c0_18, %c0_19] : memref<1x8x8xf32, #tpu.memory_space<vmem>>, vector<1x8x8xf32>
      %cst_20 = arith.constant dense<0xFF800000> : vector<1x8xf32>
      %29 = vector.multi_reduction <maximumf>, %28, %cst_20 [2] : vector<1x8x8xf32> to vector<1x8xf32>
      %30 = vector.shape_cast %29 : vector<1x8xf32> to vector<1x8x1xf32>
      %cst_21 = arith.constant dense<0xFF800000> : vector<8x1xf32>
      %31 = vector.multi_reduction <maximumf>, %30, %cst_21 [0] : vector<1x8x1xf32> to vector<8x1xf32>
      %32 = vector.shape_cast %31 : vector<8x1xf32> to vector<1x8x1xf32>
      %33 = vector.broadcast %32 : vector<1x8x1xf32> to vector<1x8x8xf32>
      %34 = arith.subf %28, %33 : vector<1x8x8xf32>
      %35 = math.exp %34 : vector<1x8x8xf32>
      %cst_22 = arith.constant dense<0.000000e+00> : vector<1x8xf32>
      %36 = vector.multi_reduction <add>, %35, %cst_22 [2] : vector<1x8x8xf32> to vector<1x8xf32>
      %37 = vector.shape_cast %36 : vector<1x8xf32> to vector<1x8x1xf32>
      %cst_23 = arith.constant dense<0.000000e+00> : vector<8x1xf32>
      %38 = vector.multi_reduction <add>, %37, %cst_23 [0] : vector<1x8x1xf32> to vector<8x1xf32>
      %39 = vector.shape_cast %38 : vector<8x1xf32> to vector<1x8x1xf32>
      %40 = tpu.reciprocal %39 : vector<1x8x1xf32> -> vector<1x8x1xf32>
      %41 = vector.broadcast %40 : vector<1x8x1xf32> to vector<1x8x8xf32>
      %42 = arith.mulf %35, %41 : vector<1x8x8xf32>
      %c0_24 = arith.constant 0 : index
      %c0_25 = arith.constant 0 : index
      %c0_26 = arith.constant 0 : index
      %43 = vector.load %arg7[%c0_24, %c0_25, %c0_26] : memref<1x8x8xf32, #tpu.memory_space<vmem>>, vector<1x8x8xf32>
      tpu.vector_store %arg7[%c0_24, %c0_25, %c0_26], %42 {strides = array<i32>} : memref<1x8x8xf32, #tpu.memory_space<vmem>>, vector<1x8x8xf32>,
    } else {
    }
    return
  }
  func.func @transform_0(%arg0: i32, %arg1: i32) -> (i32, i32) {
    %c0_i32 = arith.constant 0 : i32
    %c0_i32_0 = arith.constant 0 : i32
    return %arg0, %c0_i32 : i32, i32
  }
  func.func @transform_1(%arg0: i32, %arg1: i32) -> (i32, i32, i32) {
    %c0_i32 = arith.constant 0 : i32
    %c0_i32_0 = arith.constant 0 : i32
    return %arg0, %arg1, %c0_i32 : i32, i32, i32
  }
  func.func @transform_2(%arg0: i32, %arg1: i32) -> (i32, i32, i32) {
    %c0_i32 = arith.constant 0 : i32
    %c0_i32_0 = arith.constant 0 : i32
    return %arg1, %arg0, %c0_i32 : i32, i32, i32
  }
  func.func @transform_3(%arg0: i32, %arg1: i32) -> (i32, i32) {
    %c0_i32 = arith.constant 0 : i32
    %c0_i32_0 = arith.constant 0 : i32
    %c0_i32_1 = arith.constant 0 : i32
    return %c0_i32, %c0_i32_0 : i32, i32
  }
  func.func @transform_4(%arg0: i32, %arg1: i32) -> (i32, i32) {
    %c0_i32 = arith.constant 0 : i32
    %c0_i32_0 = arith.constant 0 : i32
    %c0_i32_1 = arith.constant 0 : i32
    return %c0_i32, %c0_i32_0 : i32, i32
  }
  func.func @transform_5(%arg0: i32, %arg1: i32) -> (i32, i32, i32) {
    %c0_i32 = arith.constant 0 : i32
    %c0_i32_0 = arith.constant 0 : i32
    %c0_i32_1 = arith.constant 0 : i32
    return %c0_i32, %arg0, %c0_i32_0 : i32, i32, i32
  }
}

</mosaic_0001>

<llo_original>
// kernel: tpu_custom_call.1
$region0: #{tpu_custom_call.1}
  #allocation0 [shape = 'u32[]', space=smem, size = 0x4, offset = 0x4, fixed_abs, tag = 'smem constant byte address 0x4 - core index']
  #allocation1 [shape = 'u32[144,128]{1,0:T(1,128)}', space=vmem, size = 0x12000, scoped, tag = 'internal scratch']
  #allocation2 [shape = 'f32[1,8,8]{2,1,0:T(8,128)}', space=vmem, size = 0x1000, scoped, tag = 'scratch operand']
  %s0 = inlined_call_operand.hbm [shape: f32[2,32], index: 0, kind: input, shape index: {}]
  %s1 = inlined_call_operand.hbm [shape: f32[2,8,32], index: 1, kind: input, shape index: {}]
  %s2 = inlined_call_operand.vmem [shape: s32[1,2,8], index: 2, kind: input, shape index: {}]
  %s3 = inlined_call_operand.hbm [shape: f32[32,32], index: 3, kind: input, shape index: {}]
  %s4 = inlined_call_operand.vmem [shape: f32[1,32], index: 4, kind: input, shape index: {}]
  %s5 = inlined_call_operand.hbm [shape: f32[1,2,8], index: 5, kind: output, shape index: {}]
  %s6 = sld [smem:[#allocation0]]
  $region46: #{tpu_custom_call.1} parent=0
    _
  %s8 = ssub.s32 1, %s6
  %s9 = scalar_select 0, %s8, %s6
  $region1: #{tpu_custom_call.1} parent=0
    #allocation3 [shape = 'u8[4096]{0}', space=vmem, size = 0x1000, scoped, tag = 'input window, operand 0, single buffered']
    #allocation4 [shape = 's32[1]{0}', space=sflag, size = 0x4, scoped, tag = 'scoped memory for tpu_custom_call.1']
    #allocation5 [shape = 's32[1]{0}', space=sflag, size = 0x4, scoped, tag = 'scoped memory for tpu_custom_call.1']
    #allocation6 [shape = 'u8[32768]{0}', space=vmem, size = 0x8000, scoped, tag = 'input window, operand 1, single buffered']
    #allocation7 [shape = 's32[1]{0}', space=sflag, size = 0x4, scoped, tag = 'scoped memory for tpu_custom_call.1']
    #allocation8 [shape = 'u8[16384]{0}', space=vmem, size = 0x4000, scoped, tag = 'input window, operand 3, single buffered']
    #allocation9 [shape = 'u8[4096]{0}', space=vmem, size = 0x1000, scoped, tag = 'output window, operand 0, single buffered']
    %10 = vsyncpa [#allocation4], 0
    %11 = vsyncpa [#allocation7], 0
    %12 = vsyncpa [#allocation5], 0
    // Predicated region
    $region2: #{tpu_custom_call.1} parent=1 // pred_check
      _
    $region3: #{tpu_custom_call.1} parent=1 // pred_check_branch
      %14 = sbr.rel (0) target = $region5
    $region4: #{tpu_custom_call.1} parent=1 // pred_region
      %s16 = ssub.s32 128, 32
      %17 = vsyncadd [#allocation4], %s16
      %s18 = sshll.u32 [#allocation3], 4
      %s19 = int_to_ptr.vmem [resolvable:$true] %s18
      %24 = dma.hbm_to_vmem [thread:$0]  %s0, 32, %s19, [#allocation4], 32, 32, 2
    $region5: #{tpu_custom_call.1} parent=1 // pred_fallthru
      _
    // Predicated region
    $region6: #{tpu_custom_call.1} parent=1 // pred_check
      _
    $region7: #{tpu_custom_call.1} parent=1 // pred_check_branch
      %26 = sbr.rel (0) target = $region9
    $region8: #{tpu_custom_call.1} parent=1 // pred_region
      %s28 = ssub.s32 1024, 256
      %29 = vsyncadd [#allocation7], %s28
      %s30 = sshll.u32 [#allocation6], 4
      %s31 = int_to_ptr.vmem [resolvable:$true] %s30
      %36 = dma.hbm_to_vmem [thread:$0]  %s1, 256, %s31, [#allocation7], 128, 128, 8
    $region9: #{tpu_custom_call.1} parent=1 // pred_fallthru
      _
    // Predicated region
    $region10: #{tpu_custom_call.1} parent=1 // pred_check
      _
    $region11: #{tpu_custom_call.1} parent=1 // pred_check_branch
      %38 = sbr.rel (0) target = $region13
    $region12: #{tpu_custom_call.1} parent=1 // pred_region
      _
    $region13: #{tpu_custom_call.1} parent=1 // pred_fallthru
      _
    // Predicated region
    $region14: #{tpu_custom_call.1} parent=1 // pred_check
      _
    $region15: #{tpu_custom_call.1} parent=1 // pred_check_branch
      %40 = sbr.rel (0) target = $region17
    $region16: #{tpu_custom_call.1} parent=1 // pred_region
      %s42 = ssub.s32 512, 512
      %43 = vsyncadd [#allocation7], %s42
      %s44 = sshll.u32 [#allocation8], 4
      %s45 = int_to_ptr.vmem [resolvable:$true] %s44
      %50 = dma.hbm_to_vmem [thread:$0]  %s3, 512, %s45, [#allocation7], 128, 128, 8
    $region17: #{tpu_custom_call.1} parent=1 // pred_fallthru
      _
    // Predicated region
    $region18: #{tpu_custom_call.1} parent=1 // pred_check
      _
    $region19: #{tpu_custom_call.1} parent=1 // pred_check_branch
      %52 = sbr.rel (0) target = $region21
    $region20: #{tpu_custom_call.1} parent=1 // pred_region
      _
    $region21: #{tpu_custom_call.1} parent=1 // pred_fallthru
      _
    // Predicated region
    $region22: #{tpu_custom_call.1} parent=1 // pred_check
      _
    $region23: #{tpu_custom_call.1} parent=1 // pred_check_branch
      %54 = sbr.rel (0) target = $region25
    $region24: #{tpu_custom_call.1} parent=1 // pred_region
      %55 = dma.done [#allocation4], 128
    $region25: #{tpu_custom_call.1} parent=1 // pred_fallthru
      _
    // Predicated region
    $region26: #{tpu_custom_call.1} parent=1 // pred_check
      _
    $region27: #{tpu_custom_call.1} parent=1 // pred_check_branch
      %57 = sbr.rel (0) target = $region29
    $region28: #{tpu_custom_call.1} parent=1 // pred_region
      %58 = dma.done [#allocation7], 1024
    $region29: #{tpu_custom_call.1} parent=1 // pred_fallthru
      _
    // Predicated region
    $region30: #{tpu_custom_call.1} parent=1 // pred_check
      _
    $region31: #{tpu_custom_call.1} parent=1 // pred_check_branch
      %60 = sbr.rel (0) target = $region33
    $region32: #{tpu_custom_call.1} parent=1 // pred_region
      %61 = dma.done [#allocation7], 512
    $region33: #{tpu_custom_call.1} parent=1 // pred_fallthru
      _
    %v62 = vld [vmem:[#allocation6] sm:$0xff]
    %v63 = vld [vmem:[#allocation6 + $0x8] sm:$0xff]
    %v64 = vld [vmem:[#allocation6 + $0x10] sm:$0xff]
    %v65 = vld [vmem:[#allocation6 + $0x18] sm:$0xff]
    %v66 = vld [vmem:[#allocation6 + $0x20] sm:$0xff]
    %v67 = vld [vmem:[#allocation6 + $0x28] sm:$0xff]
    %v68 = vld [vmem:[#allocation6 + $0x30] sm:$0xff]
    %v69 = vld [vmem:[#allocation6 + $0x38] sm:$0xff]
    %v70 = vld [vmem:[#allocation8] sm:$0xff]
    %v71 = vld [vmem:[#allocation8 + $0x8] sm:$0xff]
    %v72 = vld [vmem:[#allocation8 + $0x10] sm:$0xff]
    %v73 = vld [vmem:[#allocation8 + $0x18] sm:$0xff]
    %vm74 = vcmask 261120
    %v76 = vsel %vm74, %v62, 0
    %v79 = vsel %vm74, %v63, 0
    %v82 = vsel %vm74, %v64, 0
    %v85 = vsel %vm74, %v65, 0
    %v88 = vsel %vm74, %v66, 0
    %v91 = vsel %vm74, %v67, 0
    %v94 = vsel %vm74, %v68, 0
    %v97 = vsel %vm74, %v69, 0
    %99 = vmatprep.subr.mxu0 0.0
    %100 = vmatpush1.msra.mxu0 %v70
    %101 = vmatprep.subr.mxu0 0.0
    %102 = vmatpush1.msra.mxu0 %v71
    %103 = vmatprep.subr.mxu0 0.0
    %104 = vmatpush1.msra.mxu0 %v72
    %105 = vmatprep.subr.mxu0 0.0
    %106 = vmatpush1.msra.mxu0 %v73
    %107 = vmatprep.subr.mxu0 0.0
    %108 = vmatpush1.msra.mxu0 0.0
    %109 = vmatprep.subr.mxu0 0.0
    %110 = vmatpush1.msra.mxu0 0.0
    %111 = vmatprep.subr.mxu0 0.0
    %112 = vmatpush1.msra.mxu0 0.0
    %113 = vmatprep.subr.mxu0 0.0
    %114 = vmatpush1.msra.mxu0 0.0
    %115 = vmatprep.subr.mxu0 0.0
    %116 = vmatpush1.msra.mxu0 0.0
    %117 = vmatprep.subr.mxu0 0.0
    %118 = vmatpush1.msra.mxu0 0.0
    %119 = vmatprep.subr.mxu0 0.0
    %120 = vmatpush1.msra.mxu0 0.0
    %121 = vmatprep.subr.mxu0 0.0
    %122 = vmatpush1.msra.mxu0 0.0
    %123 = vmatprep.subr.mxu0 0.0
    %124 = vmatpush1.msra.mxu0 0.0
    %125 = vmatprep.subr.mxu0 0.0
    %126 = vmatpush1.msra.mxu0 0.0
    %127 = vmatprep.subr.mxu0 0.0
    %128 = vmatpush1.msra.mxu0 0.0
    %129 = vmatprep.subr.mxu0 0.0
    %130 = vmatpush1.msra.mxu0 0.0
    %131 = vmatprep.subr.mxu0 0.0
    %132 = vmatpush1.msra.mxu0 0.0
    %133 = vmatprep.subr.mxu0 0.0
    %134 = vmatpush1.msra.mxu0 0.0
    %135 = vmatprep.subr.mxu0 0.0
    %136 = vmatpush1.msra.mxu0 0.0
    %137 = vmatprep.subr.mxu0 0.0
    %138 = vmatpush1.msra.mxu0 0.0
    %139 = vmatprep.subr.mxu0 0.0
    %140 = vmatpush1.msra.mxu0 0.0
    %141 = vmatprep.subr.mxu0 0.0
    %142 = vmatpush1.msra.mxu0 0.0
    %143 = vmatprep.subr.mxu0 0.0
    %144 = vmatpush1.msra.mxu0 0.0
    %145 = vmatprep.subr.mxu0 0.0
    %146 = vmatpush1.msra.mxu0 0.0
    %147 = vmatprep.subr.mxu0 0.0
    %148 = vmatpush1.msra.mxu0 0.0
    %149 = vmatprep.subr.mxu0 0.0
    %150 = vmatpush1.msra.mxu0 0.0
    %151 = vmatprep.subr.mxu0 0.0
    %152 = vmatpush1.msra.mxu0 0.0
    %153 = vmatprep.subr.mxu0 0.0
    %154 = vmatpush1.msra.mxu0 0.0
    %155 = vmatprep.subr.mxu0 0.0
    %156 = vmatpush1.msra.mxu0 0.0
    %157 = vmatprep.subr.mxu0 0.0
    %158 = vmatpush1.msra.mxu0 0.0
    %159 = vmatprep.subr.mxu0 0.0
    %160 = vmatpush1.msra.mxu0 0.0
    %161 = vmatprep.subr.mxu0 0.0
    %162 = vmatpush1.msra.mxu0 0.0
    %163 = vmatprep.mubr.f32.mxu0 0.0
    %164 = vmatmul.mubr.f32.gmra.mrb[0].mxu0 %v76
    %v165 = vpop.f32.mrb[0].mxu0
    %v166 = vadd.f32 0.0, %v165
    %v167 = vpop.f32.mrb[0].mxu0
    %168 = vmatprep.mubr.f32.mxu0 0.0
    %169 = vmatmul.mubr.f32.gmra.mrb[0].mxu0 %v79
    %v170 = vpop.f32.mrb[0].mxu0
    %v171 = vadd.f32 0.0, %v170
    %v172 = vpop.f32.mrb[0].mxu0
    %173 = vmatprep.mubr.f32.mxu0 0.0
    %174 = vmatmul.mubr.f32.gmra.mrb[0].mxu0 %v82
    %v175 = vpop.f32.mrb[0].mxu0
    %v176 = vadd.f32 0.0, %v175
    %v177 = vpop.f32.mrb[0].mxu0
    %178 = vmatprep.mubr.f32.mxu0 0.0
    %179 = vmatmul.mubr.f32.gmra.mrb[0].mxu0 %v85
    %v180 = vpop.f32.mrb[0].mxu0
    %v181 = vadd.f32 0.0, %v180
    %v182 = vpop.f32.mrb[0].mxu0
    %183 = vmatprep.mubr.f32.mxu0 0.0
    %184 = vmatmul.mubr.f32.gmra.mrb[0].mxu0 %v88
    %v185 = vpop.f32.mrb[0].mxu0
    %v186 = vadd.f32 0.0, %v185
    %v187 = vpop.f32.mrb[0].mxu0
    %188 = vmatprep.mubr.f32.mxu0 0.0
    %189 = vmatmul.mubr.f32.gmra.mrb[0].mxu0 %v91
    %v190 = vpop.f32.mrb[0].mxu0
    %v191 = vadd.f32 0.0, %v190
    %v192 = vpop.f32.mrb[0].mxu0
    %193 = vmatprep.mubr.f32.mxu0 0.0
    %194 = vmatmul.mubr.f32.gmra.mrb[0].mxu0 %v94
    %v195 = vpop.f32.mrb[0].mxu0
    %v196 = vadd.f32 0.0, %v195
    %v197 = vpop.f32.mrb[0].mxu0
    %198 = vmatprep.mubr.f32.mxu0 0.0
    %199 = vmatmul.mubr.f32.gmra.mrb[0].mxu0 %v97
    %v200 = vpop.f32.mrb[0].mxu0
    %v201 = vadd.f32 0.0, %v200
    %v202 = vpop.f32.mrb[0].mxu0
    %203 = vdwg.mxu0
    %v204 = vld [vmem:[#allocation3] sm:$0xff]
    %v206 = vcombine.high %v204, %v204
    %v208 = vunpack.c.l.s4 1966171168
    %v209 = vunpack.c.0.s8 %v208
    %v210 = vlaneseq
    %v211 = vshrl.u32 %v210, 7
    %v212 = vsub.s32 %v209, %v211
    %v213 = vrot.slane %v204, %v212
    %v215 = vunpack.c.l.s4 1966171168
    %v216 = vunpack.c.0.s8 %v215
    %v217 = vlaneseq
    %v218 = vshrl.u32 %v217, 7
    %v219 = vsub.s32 %v216, %v218
    %v220 = vrot.slane %v206, %v219
    %v221 = vcombine.high %v213, %v213
    %v222 = vcombine.high %v220, %v220
    %v224 = vunpack.c.l.s4 1966171168
    %v225 = vunpack.c.0.s8 %v224
    %v226 = vlaneseq
    %v227 = vshrl.u32 %v226, 7
    %v228 = vsub.s32 %v225, %v227
    %v229 = vrot.slane %v213, %v228
    %v231 = vunpack.c.l.s4 1966171168
    %v232 = vunpack.c.0.s8 %v231
    %v233 = vlaneseq
    %v234 = vshrl.u32 %v233, 7
    %v235 = vsub.s32 %v232, %v234
    %v236 = vrot.slane %v220, %v235
    %v238 = vunpack.c.l.s4 1966171168
    %v239 = vunpack.c.0.s8 %v238
    %v240 = vlaneseq
    %v241 = vshrl.u32 %v240, 7
    %v242 = vsub.s32 %v239, %v241
    %v243 = vrot.slane %v221, %v242
    %v245 = vunpack.c.l.s4 1966171168
    %v246 = vunpack.c.0.s8 %v245
    %v247 = vlaneseq
    %v248 = vshrl.u32 %v247, 7
    %v249 = vsub.s32 %v246, %v248
    %v250 = vrot.slane %v222, %v249
    %v251 = vcombine.high %v229, %v229
    %v252 = vcombine.high %v236, %v236
    %v253 = vcombine.high %v243, %v243
    %v254 = vcombine.high %v250, %v250
    %v255 = vlaneseq
    %v256 = vshrl.u32 %v255, 7
    %v257 = vsub.s32 0, %v256
    %v258 = vrot.slane %v229, %v257
    %v259 = vlaneseq
    %v260 = vshrl.u32 %v259, 7
    %v261 = vsub.s32 0, %v260
    %v262 = vrot.slane %v243, %v261
    %v263 = vlaneseq
    %v264 = vshrl.u32 %v263, 7
    %v265 = vsub.s32 0, %v264
    %v266 = vrot.slane %v251, %v265
    %v267 = vlaneseq
    %v268 = vshrl.u32 %v267, 7
    %v269 = vsub.s32 0, %v268
    %v270 = vrot.slane %v253, %v269
    %v271 = vlaneseq
    %v272 = vshrl.u32 %v271, 7
    %v273 = vsub.s32 0, %v272
    %v274 = vrot.slane %v236, %v273
    %v275 = vlaneseq
    %v276 = vshrl.u32 %v275, 7
    %v277 = vsub.s32 0, %v276
    %v278 = vrot.slane %v250, %v277
    %v279 = vlaneseq
    %v280 = vshrl.u32 %v279, 7
    %v281 = vsub.s32 0, %v280
    %v282 = vrot.slane %v252, %v281
    %v283 = vlaneseq
    %v284 = vshrl.u32 %v283, 7
    %v285 = vsub.s32 0, %v284
    %v286 = vrot.slane %v254, %v285
    %v295 = vadd.f32 %v166, %v258
    %v296 = vadd.f32 %v171, %v262
    %v297 = vadd.f32 %v176, %v266
    %v298 = vadd.f32 %v181, %v270
    %v299 = vadd.f32 %v186, %v274
    %v300 = vadd.f32 %v191, %v278
    %v301 = vadd.f32 %v196, %v282
    %v302 = vadd.f32 %v201, %v286
    %v303 = vtanh.pop %v295
    %v304 = vtanh.pop %v296
    %v305 = vtanh.pop %v297
    %v306 = vtanh.pop %v298
    %v307 = vtanh.pop %v299
    %v308 = vtanh.pop %v300
    %v309 = vtanh.pop %v301
    %v310 = vtanh.pop %v302
    %v311 = vld [vmem:[%s4] sm:$0x1]
    %v313 = vlaneseq
    %v314 = vshrl.u32 %v313, 7
    %v315 = vsub.s32 0, %v314
    %v316 = vrot.slane %v311, %v315
    %v318 = vmul.f32 %v303, %v316
    %v319 = vmul.f32 %v304, %v316
    %v320 = vmul.f32 %v305, %v316
    %v321 = vmul.f32 %v306, %v316
    %v322 = vmul.f32 %v307, %v316
    %v323 = vmul.f32 %v308, %v316
    %v324 = vmul.f32 %v309, %v316
    %v325 = vmul.f32 %v310, %v316
    %v326 = vsel %vm74, %v318, 0.0
    %327 = vadd.xlane.f32.xlu0 %v326
    %v328 = vpop.xlane.xlu0 %327
    %v329 = vsel %vm74, %v319, 0.0
    %330 = vadd.xlane.f32.xlu0 %v329
    %v331 = vpop.xlane.xlu0 %330
    %v332 = vsel %vm74, %v320, 0.0
    %333 = vadd.xlane.f32.xlu0 %v332
    %v334 = vpop.xlane.xlu0 %333
    %v335 = vsel %vm74, %v321, 0.0
    %336 = vadd.xlane.f32.xlu0 %v335
    %v337 = vpop.xlane.xlu0 %336
    %v338 = vsel %vm74, %v322, 0.0
    %339 = vadd.xlane.f32.xlu0 %v338
    %v340 = vpop.xlane.xlu0 %339
    %v341 = vsel %vm74, %v323, 0.0
    %342 = vadd.xlane.f32.xlu0 %v341
    %v343 = vpop.xlane.xlu0 %342
    %v344 = vsel %vm74, %v324, 0.0
    %345 = vadd.xlane.f32.xlu0 %v344
    %v346 = vpop.xlane.xlu0 %345
    %v347 = vsel %vm74, %v325, 0.0
    %348 = vadd.xlane.f32.xlu0 %v347
    %v349 = vpop.xlane.xlu0 %348
    %v350 = vld [vmem:[%s2] sm:$0xff]
    %vm351 = vcmp.eq.s32.totalorder %v350, 0
    %v360 = vlaneseq
    %v361 = vand.u32 %v360, 127
    %v362 = vlaneseq
    %v363 = vshrl.u32 %v362, 7
    %v364 = vsub.s32 %v361, %v363
    %v365 = vrot.slane %v328, %v364
    %v366 = vlaneseq
    %v367 = vshrl.u32 %v366, 7
    %v368 = vsub.s32 %v361, %v367
    %v369 = vrot.slane %v331, %v368
    %v370 = vlaneseq
    %v371 = vshrl.u32 %v370, 7
    %v372 = vsub.s32 %v361, %v371
    %v373 = vrot.slane %v334, %v372
    %v374 = vlaneseq
    %v375 = vshrl.u32 %v374, 7
    %v376 = vsub.s32 %v361, %v375
    %v377 = vrot.slane %v337, %v376
    %v378 = vlaneseq
    %v379 = vshrl.u32 %v378, 7
    %v380 = vsub.s32 %v361, %v379
    %v381 = vrot.slane %v340, %v380
    %v382 = vlaneseq
    %v383 = vshrl.u32 %v382, 7
    %v384 = vsub.s32 %v361, %v383
    %v385 = vrot.slane %v343, %v384
    %v386 = vlaneseq
    %v387 = vshrl.u32 %v386, 7
    %v388 = vsub.s32 %v361, %v387
    %v389 = vrot.slane %v346, %v388
    %v390 = vlaneseq
    %v391 = vshrl.u32 %v390, 7
    %v392 = vsub.s32 %v361, %v391
    %v393 = vrot.slane %v349, %v392
    %vm394 = vcmask 1041409
    %v395 = vsel %vm394, %v369, %v365
    %vm396 = vcmask 1042434
    %v397 = vsel %vm396, %v373, %v395
    %vm398 = vcmask 1043459
    %v399 = vsel %vm398, %v377, %v397
    %vm400 = vcmask 1044484
    %v401 = vsel %vm400, %v381, %v399
    %vm402 = vcmask 1045509
    %v403 = vsel %vm402, %v385, %v401
    %vm404 = vcmask 1046534
    %v405 = vsel %vm404, %v389, %v403
    %vm406 = vcmask 1047559
    %v407 = vsel %vm406, %v393, %v405
    %v409 = vsel %vm351, -1e+10, %v407
    %s410 = smul.u32 0, 8
    %s411 = scalar_lea.vmem [#allocation2], %s410
    %vm412 = vcmask 64512
    %413 = vst.msk [vmem:[%s411] sm:$0xff] %vm412, %v409
    %p414 = scmp.eq.s32.totalorder 0, 0
    // Predicated region
    $region34: #{tpu_custom_call.1} parent=1 // pred_check
      %p415 = pneg %p414
    $region35: #{tpu_custom_call.1} parent=1 // pred_check_branch
      %417 = sbr.rel (%p415) target = $region37
    $region36: #{tpu_custom_call.1} parent=1 // pred_region
      %v418 = vld [vmem:[#allocation2] sm:$0xff]
      %v419 = vsel %vm412, %v418, -inf
      %420 = vmax.xlane.f32.xlu0 %v419
      %v421 = vpop.xlane.xlu0 %420
      %v422 = vsub.f32 %v418, %v421
      %v423 = vmul.f32 %v422, 1.442695
      %v424 = vpow.pop %v423
      %v425 = vsel %vm412, %v424, 0.0
      %426 = vadd.xlane.f32.xlu0 %v425
      %v427 = vpop.xlane.xlu0 %426
      %v428 = vadd.f32 %v427, 0.0
      %v429 = vrcp.pop %v428
      %v430 = vmul.f32 %v424, %v429
      %431 = vst.msk [vmem:[#allocation9] sm:$0xff] %vm412, %v430
    $region37: #{tpu_custom_call.1} parent=1 // pred_fallthru
      _
    // Predicated region
    $region38: #{tpu_custom_call.1} parent=1 // pred_check
      _
    $region39: #{tpu_custom_call.1} parent=1 // pred_check_branch
      %433 = sbr.rel (0) target = $region41
    $region40: #{tpu_custom_call.1} parent=1 // pred_region
      %s435 = ssub.s32 128, 32
      %436 = vsyncadd [#allocation5], %s435
      %s437 = sshll.u32 [#allocation9], 4
      %s438 = int_to_ptr.vmem [resolvable:$true] %s437
      %443 = dma.vmem_to_hbm [thread:$0]  %s438, 32, %s5, [#allocation5], 32, 32, 2
    $region41: #{tpu_custom_call.1} parent=1 // pred_fallthru
      _
    // Predicated region
    $region42: #{tpu_custom_call.1} parent=1 // pred_check
      _
    $region43: #{tpu_custom_call.1} parent=1 // pred_check_branch
      %445 = sbr.rel (0) target = $region45
    $region44: #{tpu_custom_call.1} parent=1 // pred_region
      %446 = dma.done [#allocation5], 128
    $region45: #{tpu_custom_call.1} parent=1 // pred_fallthru
      _
    %447 = vsyncpa [#allocation4], 1
    %448 = vsyncpa [#allocation7], 1
    %449 = vsyncpa [#allocation5], 1

</llo_original>
